<compile_context>
chip_gen: v7x
topology: tpu7x:2x2x1
jax: 0.10.0
libtpu: 0.0.40
codegen_flags: <defaults>
</compile_context>

<pallas_src>
import functools

import jax
import jax.numpy as jnp
from jax import lax
from jax.experimental import pallas as pl
from jax.experimental.pallas import tpu as pltpu

_LANE = 128


def _cdiv(a, b):
    return (a + b - 1) // b


def _round_up(x, m):
    return ((x + m - 1) // m) * m


def _sublane_multiple(dtype):
    size = jnp.dtype(dtype).itemsize
    return {4: 8, 2: 16, 1: 32}.get(size, 8)


def _cyclic_error_sq(converted_degrees, L, cyclic_indices, packed,
                     pred_ref, targ_ref):
    """f32 squared cyclic error for the current (tb, W) tile."""
    err = pred_ref[...].astype(jnp.float32) - targ_ref[...].astype(jnp.float32)
    if cyclic_indices:
        abs_err = jnp.abs(err)
        cyc_err = jnp.minimum(abs_err, converted_degrees - abs_err)
        lane = lax.broadcasted_iota(jnp.int32, err.shape, err.ndim - 1)
        col = lane % L if packed else lane
        mask = functools.reduce(
            jnp.logical_or, [col == int(i) for i in cyclic_indices])
        err = jnp.where(mask, cyc_err, err)
    return err * err


def _sum_kernel(converted_degrees, L, cyclic_indices, packed,
                pred_ref, targ_ref, psum_ref):
    # 'mean' path: tiny per-tile partial sums only (no (B, L) writeback).
    sq = _cyclic_error_sq(converted_degrees, L, cyclic_indices, packed,
                          pred_ref, targ_ref)
    tb, w = sq.shape
    if w % _LANE == 0 and w > _LANE:
        # Fold lane groups with aligned 128-lane slices (pure VPU adds).
        acc = sq[:, 0:_LANE]
        for g in range(1, w // _LANE):
            acc = acc + sq[:, g * _LANE:(g + 1) * _LANE]
    else:
        acc = sq
    h = acc.shape[1]
    psum_ref[...] = jnp.sum(acc.reshape(tb // 8, 8, h), axis=0)[None]


def _sq_kernel(converted_degrees, L, cyclic_indices, packed,
               pred_ref, targ_ref, sq_ref):
    # 'none' path: squared error only, no reduction work.
    sq = _cyclic_error_sq(converted_degrees, L, cyclic_indices, packed,
                          pred_ref, targ_ref)
    sq_ref[...] = sq.astype(sq_ref.dtype)


def make_cyclic_mse_loss(cyclic_indices, output_length, norm_data=True):
    """Builds a callable mirroring cyclicMSELoss.forward."""
    if norm_data:
        converted_degrees = 360.0 / 107.8809532565079
    else:
        converted_degrees = 360.0

    L = int(output_length)
    cyc = tuple(int(i) for i in cyclic_indices)
    packed = (_LANE % L == 0)          # lane-pack 128//L samples per row
    W = _LANE if packed else L

    def loss_fn(predictions, targets, reduction='mean', tile_rows=None):
        if predictions.shape != targets.shape:
            raise ValueError('predictions/targets shape mismatch')
        B, L_in = predictions.shape
        if L_in != L:
            raise ValueError('feature dim must equal output_length')
        if reduction not in ('mean', 'none'):
            raise ValueError('Invalid reduction type for cyclicMSELoss')

        in_dtype = predictions.dtype
        in_item = jnp.dtype(in_dtype).itemsize
        sub = _sublane_multiple(in_dtype)

        total = B * L
        rows = _cdiv(total, _LANE) if packed else B

        # ---- tile sizing: big tiles, minimal batch padding ---------------
        per_row = (4 * in_item + 3 * 4) * W        # 2 dbl-buf inputs + f32 temps
        if reduction == 'none':
            per_row += 2 * in_item * W             # dbl-buffered output tile
        budget = 10 * 1024 * 1024                  # streamed-buffer budget
        max_rows = max(sub, min(2048, budget // max(per_row, 1)))
        max_rows = (max_rows // sub) * sub

        if tile_rows is not None:
            tb = max(sub, _round_up(int(tile_rows), sub))
            num_tiles = _cdiv(rows, tb)
        else:
            num_tiles = _cdiv(rows, max_rows)
            if num_tiles == 1 and rows >= 128:
                num_tiles = 2                      # keep both v7x TCs busy
            tb = _round_up(_cdiv(rows, num_tiles), sub)
        rows_p = tb * num_tiles

        # ---- input prep (zero padding contributes zero squared error) ----
        if packed:
            pred_flat = predictions.reshape(-1)
            targ_flat = targets.reshape(-1)
            pad_elems = rows_p * _LANE - total
            if pad_elems:
                pred_flat = jnp.pad(pred_flat, (0, pad_elems))
                targ_flat = jnp.pad(targ_flat, (0, pad_elems))
            pred_in = pred_flat.reshape(rows_p, _LANE)
            targ_in = targ_flat.reshape(rows_p, _LANE)
        else:
            pad_rows = rows_p - B
            if pad_rows:
                pred_in = jnp.pad(predictions, ((0, pad_rows), (0, 0)))
                targ_in = jnp.pad(targets, ((0, pad_rows), (0, 0)))
            else:
                pred_in, targ_in = predictions, targets

        in_specs = [
            pl.BlockSpec((tb, W), lambda i: (i, 0)),
            pl.BlockSpec((tb, W), lambda i: (i, 0)),
        ]
        cparams = pltpu.CompilerParams(
            dimension_semantics=("parallel",),
            vmem_limit_bytes=32 * 1024 * 1024,
        )

        if reduction == 'mean':
            w_out = _LANE if W % _LANE == 0 else W
            kernel = functools.partial(
                _sum_kernel, converted_degrees, L, cyc, packed)
            psums = pl.pallas_call(
                kernel,
                out_shape=jax.ShapeDtypeStruct((num_tiles, 8, w_out),
                                               jnp.float32),
                grid_spec=pltpu.PrefetchScalarGridSpec(
                    num_scalar_prefetch=0,
                    grid=(num_tiles,),
                    in_specs=in_specs,
                    out_specs=pl.BlockSpec((1, 8, w_out),
                                           lambda i: (i, 0, 0)),
                ),
                compiler_params=cparams,
            )(pred_in, targ_in)
            return jnp.sum(psums) / jnp.float32(total)
        else:  # 'none'
            kernel = functools.partial(
                _sq_kernel, converted_degrees, L, cyc, packed)
            sq = pl.pallas_call(
                kernel,
                out_shape=jax.ShapeDtypeStruct((rows_p, W), in_dtype),
                grid_spec=pltpu.PrefetchScalarGridSpec(
                    num_scalar_prefetch=0,
                    grid=(num_tiles,),
                    in_specs=in_specs,
                    out_specs=pl.BlockSpec((tb, W), lambda i: (i, 0)),
                ),
                compiler_params=cparams,
            )(pred_in, targ_in)
            if packed:
                flat = sq.reshape(-1)
                if rows_p * _LANE != total:
                    flat = flat[:total]
                return flat.reshape(B, L)
            return sq[:B] if rows_p != B else sq

    return loss_fn


def _reference(predictions, targets, cyclic_indices, norm_data=True,
               reduction='mean'):
    L = predictions.shape[1]
    cmap = jnp.zeros((L,), jnp.bool_)
    if len(cyclic_indices) > 0:
        cmap = cmap.at[jnp.asarray(cyclic_indices)].set(True)
    c = 360.0 / 107.8809532565079 if norm_data else 360.0
    err = predictions - targets
    a = jnp.abs(err)
    err = jnp.where(cmap[None, :], jnp.minimum(a, c - a), err)
    sq = err ** 2
    return jnp.mean(sq) if reduction == 'mean' else sq


def _check(loss_fn, pred, targ, cyc, **kw):
    m = loss_fn(pred, targ, 'mean', **kw)
    n = loss_fn(pred, targ, 'none', **kw)
    jax.block_until_ready((m, n))
    assert jnp.allclose(m, _reference(pred, targ, cyc, reduction='mean'),
                        atol=1e-5, rtol=1e-5), "mean mismatch"
    assert jnp.allclose(n, _reference(pred, targ, cyc, reduction='none'),
                        atol=1e-5, rtol=1e-5), "none mismatch"


if __name__ == "__main__":
    key = jax.random.PRNGKey(0)
    ks = jax.random.split(key, 8)

    # Case 1: lane-packed path (L=16 -> 8 samples per 128-lane row), tiny batch.
    L1, CYC1 = 16, [1, 3, 7, 11]
    loss1 = make_cyclic_mse_loss(CYC1, L1, norm_data=True)
    p1 = jax.random.normal(ks[0], (2, L1), jnp.float32) * 2.0
    t1 = jax.random.normal(ks[1], (2, L1), jnp.float32) * 2.0
    _check(loss1, p1, t1, CYC1)

    # Case 2: lane-packed path, multiple tiles (200*16 elems -> 25 packed rows,
    # tile_rows=8 -> 4-tile grid exercising the partial-sum path).
    p2 = jax.random.normal(ks[2], (200, L1), jnp.float32) * 2.0
    t2 = jax.random.normal(ks[3], (200, L1), jnp.float32) * 2.0
    _check(loss1, p2, t2, CYC1, tile_rows=8)

    # Case 3: non-packed path (L=100, full-extent lane dim, no column pad),
    # ragged batch (20 rows -> one 24-row tile with 4 zero-padded rows).
    L3, CYC3 = 100, [0, 5, 17, 63, 99]
    loss3 = make_cyclic_mse_loss(CYC3, L3, norm_data=True)
    p3 = jax.random.normal(ks[4], (20, L3), jnp.float32) * 2.0
    t3 = jax.random.normal(ks[5], (20, L3), jnp.float32) * 2.0
    _check(loss3, p3, t3, CYC3)

    # Case 4: wide feature dim (L=256 = 2 lane groups) exercising the
    # lane-group folding in the 'mean' partial sums.
    L4, CYC4 = 256, [0, 7, 128, 200, 255]
    loss4 = make_cyclic_mse_loss(CYC4, L4, norm_data=True)
    p4 = jax.random.normal(ks[6], (40, L4), jnp.float32) * 2.0
    t4 = jax.random.normal(ks[7], (40, L4), jnp.float32) * 2.0
    _check(loss4, p4, t4, CYC4)

    print("KERNEL_OK")
</pallas_src>

<mosaic_0001>
module attributes {stable_mosaic.version = 11 : i64} {
  func.func @_sum_kernel(%arg0: i32, %arg1: memref<8x128xf32, #tpu.memory_space<vmem>>, %arg2: memref<8x128xf32, #tpu.memory_space<vmem>>, %arg3: memref<1x8x128xf32, #tpu.memory_space<vmem>>) attributes {dimension_semantics = [#tpu.dimension_semantics<parallel>], iteration_bounds = array<i64: 1>, scalar_prefetch = 0 : i64, scratch_operands = 0 : i64, tpu.core_type = #tpu.core_type<tc>, window_params = [{transform_indices = @transform_0, window_bounds = array<i64: 8, 128>}, {transform_indices = @transform_1, window_bounds = array<i64: 8, 128>}, {transform_indices = @transform_2, window_bounds = array<i64: 1, 8, 128>}]} {
    %c0 = arith.constant 0 : index
    %c0_0 = arith.constant 0 : index
    %0 = vector.load %arg1[%c0, %c0_0] : memref<8x128xf32, #tpu.memory_space<vmem>>, vector<8x128xf32>
    %c0_1 = arith.constant 0 : index
    %c0_2 = arith.constant 0 : index
    %1 = vector.load %arg2[%c0_1, %c0_2] : memref<8x128xf32, #tpu.memory_space<vmem>>, vector<8x128xf32>
    %2 = arith.subf %0, %1 : vector<8x128xf32>
    %3 = math.absf %2 : vector<8x128xf32>
    %cst = arith.constant 3.33701158 : f32
    %4 = vector.broadcast %cst : f32 to vector<8x128xf32>
    %5 = arith.subf %4, %3 : vector<8x128xf32>
    %6 = arith.minimumf %3, %5 : vector<8x128xf32>
    %7 = tpu.iota {dimensions = array<i32: 1>} : vector<8x128xi32>
    %c16_i32 = arith.constant 16 : i32
    %c0_i32 = arith.constant 0 : i32
    %8 = arith.cmpi eq, %c16_i32, %c0_i32 : i32
    %c1_i32 = arith.constant 1 : i32
    %9 = arith.select %8, %c1_i32, %c16_i32 : i32
    %10 = vector.broadcast %9 : i32 to vector<8x128xi32>
    %11 = arith.remsi %7, %10 : vector<8x128xi32>
    %c0_i32_3 = arith.constant 0 : i32
    %12 = vector.broadcast %c0_i32_3 : i32 to vector<8x128xi32>
    %13 = arith.cmpi ne, %11, %12 : vector<8x128xi32>
    %c0_i32_4 = arith.constant 0 : i32
    %14 = vector.broadcast %c0_i32_4 : i32 to vector<8x128xi32>
    %15 = arith.cmpi slt, %11, %14 : vector<8x128xi32>
    %c0_i32_5 = arith.constant 0 : i32
    %16 = arith.cmpi slt, %9, %c0_i32_5 : i32
    %17 = vector.broadcast %16 : i1 to vector<8x128xi1>
    %18 = vector.broadcast %17 : vector<8x128xi1> to vector<8x128xi1>
    %19 = arith.xori %15, %18 : vector<8x128xi1>
    %20 = arith.andi %19, %13 : vector<8x128xi1>
    %21 = vector.broadcast %9 : i32 to vector<8x128xi32>
    %22 = arith.addi %11, %21 : vector<8x128xi32>
    %23 = arith.select %20, %22, %11 : vector<8x128xi1>, vector<8x128xi32>
    %c1_i32_6 = arith.constant 1 : i32
    %24 = vector.broadcast %c1_i32_6 : i32 to vector<8x128xi32>
    %25 = arith.cmpi eq, %23, %24 : vector<8x128xi32>
    %c3_i32 = arith.constant 3 : i32
    %26 = vector.broadcast %c3_i32 : i32 to vector<8x128xi32>
    %27 = arith.cmpi eq, %23, %26 : vector<8x128xi32>
    %c7_i32 = arith.constant 7 : i32
    %28 = vector.broadcast %c7_i32 : i32 to vector<8x128xi32>
    %29 = arith.cmpi eq, %23, %28 : vector<8x128xi32>
    %c11_i32 = arith.constant 11 : i32
    %30 = vector.broadcast %c11_i32 : i32 to vector<8x128xi32>
    %31 = arith.cmpi eq, %23, %30 : vector<8x128xi32>
    %32 = arith.ori %25, %27 : vector<8x128xi1>
    %33 = arith.ori %32, %29 : vector<8x128xi1>
    %34 = arith.ori %33, %31 : vector<8x128xi1>
    %35 = arith.select %34, %6, %2 : vector<8x128xi1>, vector<8x128xf32>
    %36 = arith.mulf %35, %35 : vector<8x128xf32>
    %37 = vector.shape_cast %36 : vector<8x128xf32> to vector<1x8x128xf32>
    %cst_7 = arith.constant dense<0.000000e+00> : vector<8x128xf32>
    %38 = vector.multi_reduction <add>, %37, %cst_7 [0] : vector<1x8x128xf32> to vector<8x128xf32>
    %39 = vector.shape_cast %38 : vector<8x128xf32> to vector<1x8x128xf32>
    %c0_8 = arith.constant 0 : index
    %c0_9 = arith.constant 0 : index
    %c0_10 = arith.constant 0 : index
    %40 = vector.load %arg3[%c0_8, %c0_9, %c0_10] : memref<1x8x128xf32, #tpu.memory_space<vmem>>, vector<1x8x128xf32>
    tpu.vector_store %arg3[%c0_8, %c0_9, %c0_10], %39 {strides = array<i32>} : memref<1x8x128xf32, #tpu.memory_space<vmem>>, vector<1x8x128xf32>,
    return
  }
  func.func @transform_0(%arg0: i32) -> (i32, i32) {
    %c0_i32 = arith.constant 0 : i32
    %c0_i32_0 = arith.constant 0 : i32
    return %arg0, %c0_i32 : i32, i32
  }
  func.func @transform_1(%arg0: i32) -> (i32, i32) {
    %c0_i32 = arith.constant 0 : i32
    %c0_i32_0 = arith.constant 0 : i32
    return %arg0, %c0_i32 : i32, i32
  }
  func.func @transform_2(%arg0: i32) -> (i32, i32, i32) {
    %c0_i32 = arith.constant 0 : i32
    %c0_i32_0 = arith.constant 0 : i32
    %c0_i32_1 = arith.constant 0 : i32
    return %arg0, %c0_i32, %c0_i32_0 : i32, i32, i32
  }
}

</mosaic_0001>

<llo_original>
// kernel: tpu_custom_call.1
$region0: #{tpu_custom_call.1}
  #allocation0 [shape = 'u32[]', space=smem, size = 0x4, offset = 0x4, fixed_abs, tag = 'smem constant byte address 0x4 - core index']
  #allocation1 [shape = 'u32[144,128]{1,0:T(1,128)}', space=vmem, size = 0x12000, scoped, tag = 'internal scratch']
  %s0 = inlined_call_operand.hbm [shape: f32[8,128], index: 0, kind: input, shape index: {}]
  %s1 = inlined_call_operand.hbm [shape: f32[8,128], index: 1, kind: input, shape index: {}]
  %s2 = inlined_call_operand.hbm [shape: f32[1,8,128], index: 2, kind: output, shape index: {}]
  %s3 = sld [smem:[#allocation0]]
  $region26: #{tpu_custom_call.1} parent=0
    _
  %s5 = ssub.s32 1, %s3
  %s6 = scalar_select 0, %s5, %s3
  $region1: #{tpu_custom_call.1} parent=0
    #allocation2 [shape = 'u8[4096]{0}', space=vmem, size = 0x1000, scoped, tag = 'input window, operand 0, single buffered']
    #allocation3 [shape = 's32[1]{0}', space=sflag, size = 0x4, scoped, tag = 'scoped memory for tpu_custom_call.1']
    #allocation4 [shape = 's32[1]{0}', space=sflag, size = 0x4, scoped, tag = 'scoped memory for tpu_custom_call.1']
    #allocation5 [shape = 'u8[4096]{0}', space=vmem, size = 0x1000, scoped, tag = 'input window, operand 1, single buffered']
    #allocation6 [shape = 's32[1]{0}', space=sflag, size = 0x4, scoped, tag = 'scoped memory for tpu_custom_call.1']
    #allocation7 [shape = 'u8[4096]{0}', space=vmem, size = 0x1000, scoped, tag = 'output window, operand 0, single buffered']
    %7 = vsyncpa [#allocation3], 0
    %8 = vsyncpa [#allocation6], 0
    %9 = vsyncpa [#allocation4], 0
    // Predicated region
    $region2: #{tpu_custom_call.1} parent=1 // pred_check
      _
    $region3: #{tpu_custom_call.1} parent=1 // pred_check_branch
      %11 = sbr.rel (0) target = $region5
    $region4: #{tpu_custom_call.1} parent=1 // pred_region
      %s13 = ssub.s32 128, 128
      %14 = vsyncadd [#allocation3], %s13
      %s16 = sshll.u32 [#allocation2], 4
      %s17 = int_to_ptr.vmem [resolvable:$true] %s16
      %19 = dma.hbm_to_vmem [thread:$0]  %s0, 128, %s17, [#allocation3]
    $region5: #{tpu_custom_call.1} parent=1 // pred_fallthru
      _
    // Predicated region
    $region6: #{tpu_custom_call.1} parent=1 // pred_check
      _
    $region7: #{tpu_custom_call.1} parent=1 // pred_check_branch
      %21 = sbr.rel (0) target = $region9
    $region8: #{tpu_custom_call.1} parent=1 // pred_region
      %s23 = ssub.s32 128, 128
      %24 = vsyncadd [#allocation6], %s23
      %s26 = sshll.u32 [#allocation5], 4
      %s27 = int_to_ptr.vmem [resolvable:$true] %s26
      %29 = dma.hbm_to_vmem [thread:$0]  %s1, 128, %s27, [#allocation6]
    $region9: #{tpu_custom_call.1} parent=1 // pred_fallthru
      _
    // Predicated region
    $region10: #{tpu_custom_call.1} parent=1 // pred_check
      _
    $region11: #{tpu_custom_call.1} parent=1 // pred_check_branch
      %31 = sbr.rel (0) target = $region13
    $region12: #{tpu_custom_call.1} parent=1 // pred_region
      %32 = dma.done [#allocation3], 128
    $region13: #{tpu_custom_call.1} parent=1 // pred_fallthru
      _
    // Predicated region
    $region14: #{tpu_custom_call.1} parent=1 // pred_check
      _
    $region15: #{tpu_custom_call.1} parent=1 // pred_check_branch
      %34 = sbr.rel (0) target = $region17
    $region16: #{tpu_custom_call.1} parent=1 // pred_region
      %35 = dma.done [#allocation6], 128
    $region17: #{tpu_custom_call.1} parent=1 // pred_fallthru
      _
    %v36 = vld [vmem:[#allocation2] sm:$0xff]
    %v37 = vld [vmem:[#allocation5] sm:$0xff]
    %v38 = vsub.f32 %v36, %v37
    %v39 = vand.u32 2147483647, %v38
    %v40 = vsub.f32 3.3370116, %v39
    %v41 = vmin.f32 %v39, %v40
    %v42 = vlaneseq
    %v43 = vand.u32 %v42, 127
    %vm44 = vcmp.lt.s32.totalorder %v43, 0
    %v45 = vsub.s32 0, %v43
    %v46 = vsel %vm44, %v45, %v43
    %v47 = vshrl.u32 %v46, 4
    %v48 = vand.u32 %v46, 15
    %v49 = vsub.s32 0, %v48
    %v50 = vsel %vm44, %v49, %v48
    %vm51 = vcmp.ne.s32.totalorder %v50, 0
    %vm52 = vcmp.lt.s32.totalorder %v50, 0
    %vm53 = vmand %vm52, %vm51
    %v54 = vadd.s32 %v50, 16
    %v55 = vsel %vm53, %v54, %v50
    %vm56 = vcmp.eq.s32.totalorder %v55, 1
    %vm57 = vcmp.eq.s32.totalorder %v55, 3
    %vm58 = vcmp.eq.s32.totalorder %v55, 7
    %vm59 = vcmp.eq.s32.totalorder %v55, 11
    %vm60 = vmor %vm56, %vm57
    %vm61 = vmor %vm60, %vm58
    %vm62 = vmor %vm61, %vm59
    %v63 = vsel %vm62, %v41, %v38
    %v64 = vmul.f32 %v63, %v63
    %v65 = vadd.f32 %v64, 0.0
    %66 = vst [vmem:[#allocation7] sm:$0xff] %v65
    // Predicated region
    $region18: #{tpu_custom_call.1} parent=1 // pred_check
      _
    $region19: #{tpu_custom_call.1} parent=1 // pred_check_branch
      %68 = sbr.rel (0) target = $region21
    $region20: #{tpu_custom_call.1} parent=1 // pred_region
      %s70 = ssub.s32 128, 128
      %71 = vsyncadd [#allocation4], %s70
      %s73 = sshll.u32 [#allocation7], 4
      %s74 = int_to_ptr.vmem [resolvable:$true] %s73
      %76 = dma.vmem_to_hbm [thread:$0]  %s74, 128, %s2, [#allocation4]
    $region21: #{tpu_custom_call.1} parent=1 // pred_fallthru
      _
    // Predicated region
    $region22: #{tpu_custom_call.1} parent=1 // pred_check
      _
    $region23: #{tpu_custom_call.1} parent=1 // pred_check_branch
      %78 = sbr.rel (0) target = $region25
    $region24: #{tpu_custom_call.1} parent=1 // pred_region
      %79 = dma.done [#allocation4], 128
    $region25: #{tpu_custom_call.1} parent=1 // pred_fallthru
      _
    %80 = vsyncpa [#allocation3], 1
    %81 = vsyncpa [#allocation6], 1
    %82 = vsyncpa [#allocation4], 1

</llo_original>
